<compile_context>
chip_gen: v7x
topology: tpu7x:2x2x1
jax: 0.10.0
libtpu: 0.0.40
codegen_flags: <defaults>
</compile_context>

<pallas_src>
import jax
import jax.numpy as jnp
from jax.experimental import pallas as pl
from jax.experimental.pallas import tpu as pltpu


def _multimodal_kernel(x_ref, a_ref, bias_ref, out_ref):
    # x_ref   : [D, B]  fused [text; image] activations, features on sublanes,
    #                    batch on lanes (lane-dense output as B grows).
    # a_ref   : [D, 1]  fully folded affine weight vector.
    # bias_ref: (1,)    folded scalar bias in SMEM.
    # Output width is 1, so use the VPU (multiply) + XLU (sublane reduce)
    # instead of an MXU dot — avoids the matmul push / result-FIFO pop latency.
    out = jnp.sum(x_ref[...] * a_ref[...], axis=0, keepdims=True) + bias_ref[0]
    out_ref[...] = out.astype(out_ref.dtype)                    # [1, B]


def prepare_params(wt, bt, wv, bv, wc, bc):
    """One-time fold of the purely affine model into a single GEMV.

    wt:[Nt,H,Dt] bt:[Nt,H] wv:[Nv,H,Di] bv:[Nv,H] wc:[1,2H] bc:[1]
    Returns (a:[Dt+Di,1], bias:(1,)).

    NOTE: valid only because there is no nonlinearity between the encoders
    and the classifier; the wc split hard-codes the [text, image] concat order.
    """
    H = wt.shape[1]
    assert wc.shape == (1, 2 * H), wc.shape      # guard the concat-order split
    wc_t = wc[:, :H].T                           # [H, 1]
    wc_v = wc[:, H:].T                           # [H, 1]
    a_t = jnp.sum(wt, axis=0).T @ wc_t           # [Dt, 1]
    a_v = jnp.sum(wv, axis=0).T @ wc_v           # [Di, 1]
    a = jnp.concatenate([a_t, a_v], axis=0)      # [Dt+Di, 1]
    bias = (jnp.sum(bt, axis=0) @ wc_t
            + jnp.sum(bv, axis=0) @ wc_v
            + bc).reshape(1)                     # (1,) -> 1-D SMEM scalar
    return a, bias


@jax.jit
def multimodal_forward(text, image, a, bias):
    """text:[B,Dt] image:[B,Di] a:[Dt+Di,1] bias:(1,) -> [B,1]"""
    B = text.shape[0]
    # Fuse the two modality inputs into one operand and put batch on the lane
    # axis; Dt+Di = 80 rows is a multiple of 8 sublanes.
    x_t = jnp.concatenate([text, image], axis=1).T           # [Dt+Di, B]

    vmem = pl.BlockSpec(memory_space=pltpu.MemorySpace.VMEM)
    smem = pl.BlockSpec(memory_space=pltpu.MemorySpace.SMEM)
    out = pl.pallas_call(
        _multimodal_kernel,
        out_shape=jax.ShapeDtypeStruct((1, B), jnp.float32),
        in_specs=[vmem, vmem, smem],
        out_specs=vmem,
    )(x_t, a, bias)
    return out.T                                              # [B, 1]


def _init_linear(key, out_features, in_features):
    # torch.nn.Linear default init: U(-1/sqrt(fan_in), 1/sqrt(fan_in))
    kw, kb = jax.random.split(key)
    bound = 1.0 / jnp.sqrt(jnp.float32(in_features))
    w = jax.random.uniform(kw, (out_features, in_features), jnp.float32,
                           minval=-bound, maxval=bound)
    b = jax.random.uniform(kb, (out_features,), jnp.float32,
                           minval=-bound, maxval=bound)
    return w, b


def _reference(text, image, wt, bt, wv, bv, wc, bc):
    # Faithful unrolled reference matching the PyTorch module exactly.
    txt = jnp.stack([text @ wt[i].T + bt[i] for i in range(wt.shape[0])], axis=1).sum(1)
    img = jnp.stack([image @ wv[i].T + bv[i] for i in range(wv.shape[0])], axis=1).sum(1)
    comb = jnp.concatenate([txt, img], axis=1)
    return comb @ wc.T + bc[None, :]


if __name__ == "__main__":
    # Small shapes consistent with the module's forward
    B = 2
    text_input_size = 32
    image_input_size = 48
    hidden_size = 32
    num_text_encoders = 2
    num_image_encoders = 3

    key = jax.random.PRNGKey(0)
    keys = jax.random.split(key, 2 + num_text_encoders + num_image_encoders + 1)

    text_input = jax.random.normal(keys[0], (B, text_input_size), jnp.float32)
    image_input = jax.random.normal(keys[1], (B, image_input_size), jnp.float32)

    # Stacked text-encoder params: [Nt, H, Dt], [Nt, H]
    tw, tb = zip(*[_init_linear(keys[2 + i], hidden_size, text_input_size)
                   for i in range(num_text_encoders)])
    wt = jnp.stack(tw)
    bt = jnp.stack(tb)

    # Stacked vision-encoder params: [Nv, H, Di], [Nv, H]
    vw, vb = zip(*[_init_linear(keys[2 + num_text_encoders + i], hidden_size, image_input_size)
                   for i in range(num_image_encoders)])
    wv = jnp.stack(vw)
    bv = jnp.stack(vb)

    # Classifier: Linear(2H, 1)
    wc, bc = _init_linear(keys[-1], 1, 2 * hidden_size)

    # One-time parameter folding (static across forward calls).
    a, bias = prepare_params(wt, bt, wv, bv, wc, bc)
    a, bias = jax.block_until_ready((a, bias))

    out = multimodal_forward(text_input, image_input, a, bias)
    out = jax.block_until_ready(out)

    ref = _reference(text_input, image_input, wt, bt, wv, bv, wc, bc)
    assert out.shape == (B, 1), out.shape
    assert jnp.allclose(out, ref, atol=1e-4, rtol=1e-4), (out, ref)

    print("KERNEL_OK")
</pallas_src>

<mosaic_0001>
module attributes {stable_mosaic.version = 11 : i64} {
  func.func @_multimodal_kernel(%arg0: memref<80x2xf32, #tpu.memory_space<vmem>>, %arg1: memref<80x1xf32, #tpu.memory_space<vmem>>, %arg2: memref<1xf32, #tpu.memory_space<smem>>, %arg3: memref<1x2xf32, #tpu.memory_space<vmem>>) attributes {dimension_semantics = [], scalar_prefetch = 0 : i64, scratch_operands = 0 : i64, tpu.core_type = #tpu.core_type<tc>} {
    %c0 = arith.constant 0 : index
    %c0_0 = arith.constant 0 : index
    %0 = vector.load %arg0[%c0, %c0_0] : memref<80x2xf32, #tpu.memory_space<vmem>>, vector<80x2xf32>
    %c0_1 = arith.constant 0 : index
    %c0_2 = arith.constant 0 : index
    %1 = vector.load %arg1[%c0_1, %c0_2] : memref<80x1xf32, #tpu.memory_space<vmem>>, vector<80x1xf32>
    %2 = vector.broadcast %1 : vector<80x1xf32> to vector<80x2xf32>
    %3 = arith.mulf %0, %2 : vector<80x2xf32>
    %cst = arith.constant dense<0.000000e+00> : vector<2xf32>
    %4 = vector.multi_reduction <add>, %3, %cst [0] : vector<80x2xf32> to vector<2xf32>
    %5 = vector.shape_cast %4 : vector<2xf32> to vector<1x2xf32>
    %c0_3 = arith.constant 0 : index
    %6 = memref.load %arg2[%c0_3] : memref<1xf32, #tpu.memory_space<smem>>
    %7 = vector.broadcast %6 : f32 to vector<1x2xf32>
    %8 = arith.addf %5, %7 : vector<1x2xf32>
    %c0_4 = arith.constant 0 : index
    %c0_5 = arith.constant 0 : index
    %9 = vector.load %arg3[%c0_4, %c0_5] : memref<1x2xf32, #tpu.memory_space<vmem>>, vector<1x2xf32>
    tpu.vector_store %arg3[%c0_4, %c0_5], %8 {strides = array<i32>} : memref<1x2xf32, #tpu.memory_space<vmem>>, vector<1x2xf32>,
    return
  }
}

</mosaic_0001>

<llo_original>
// kernel: multimodal_forward.1
$region0: #{multimodal_forward.1}
  #allocation0 [shape = 'u32[]', space=smem, size = 0x4, offset = 0x4, fixed_abs, tag = 'smem constant byte address 0x4 - core index']
  #allocation1 [shape = 'u32[144,128]{1,0:T(1,128)}', space=vmem, size = 0x12000, scoped, tag = 'internal scratch']
  #allocation2 [shape = 'f32[1]{0:T(128)S(6)}', space=smem, size = 0x200, scoped, tag = 'scoped memory for multimodal_forward.1']
  %s0 = inlined_call_operand.vmem [shape: f32[80,2], index: 0, kind: input, shape index: {}]
  %s1 = inlined_call_operand.vmem [shape: f32[80,1], index: 1, kind: input, shape index: {}]
  %s2 = inlined_call_operand.<no memory space> [shape: f32[1], index: 2, kind: input, shape index: {}]
  %s3 = inlined_call_operand.hbm [shape: f32[1,2], index: 3, kind: output, shape index: {}]
  %s4 = sld [smem:[#allocation0]]
  $region22: #{multimodal_forward.1} parent=0
    _
  %s6 = ssub.s32 1, %s4
  %s7 = scalar_select 0, %s6, %s4
  %8 = sst [smem:[#allocation2]] %s2
  $region1: #{multimodal_forward.1} parent=0
    #allocation3 [shape = 'u8[512]{0}', space=vmem, size = 0x400, scoped, tag = 'output window, operand 0, single buffered']
    #allocation4 [shape = 's32[1]{0}', space=sflag, size = 0x4, scoped, tag = 'scoped memory for multimodal_forward.1']
    %9 = vsyncpa [#allocation4], 0
    // Predicated region
    $region2: #{multimodal_forward.1} parent=1 // pred_check
      _
    $region3: #{multimodal_forward.1} parent=1 // pred_check_branch
      %11 = sbr.rel (0) target = $region5
    $region4: #{multimodal_forward.1} parent=1 // pred_region
      _
    $region5: #{multimodal_forward.1} parent=1 // pred_fallthru
      _
    // Predicated region
    $region6: #{multimodal_forward.1} parent=1 // pred_check
      _
    $region7: #{multimodal_forward.1} parent=1 // pred_check_branch
      %13 = sbr.rel (0) target = $region9
    $region8: #{multimodal_forward.1} parent=1 // pred_region
      _
    $region9: #{multimodal_forward.1} parent=1 // pred_fallthru
      _
    // Predicated region
    $region10: #{multimodal_forward.1} parent=1 // pred_check
      _
    $region11: #{multimodal_forward.1} parent=1 // pred_check_branch
      %15 = sbr.rel (0) target = $region13
    $region12: #{multimodal_forward.1} parent=1 // pred_region
      _
    $region13: #{multimodal_forward.1} parent=1 // pred_fallthru
      _
    %v16 = vld [vmem:[%s0] sm:$0xff]
    %v17 = vld [vmem:[%s0 + $0x8] sm:$0xff]
    %v18 = vld [vmem:[%s0 + $0x10] sm:$0xff]
    %v19 = vld [vmem:[%s0 + $0x18] sm:$0xff]
    %v20 = vld [vmem:[%s0 + $0x20] sm:$0xff]
    %v21 = vld [vmem:[%s0 + $0x28] sm:$0xff]
    %v22 = vld [vmem:[%s0 + $0x30] sm:$0xff]
    %v23 = vld [vmem:[%s0 + $0x38] sm:$0xff]
    %v24 = vld [vmem:[%s0 + $0x40] sm:$0xff]
    %v25 = vld [vmem:[%s0 + $0x48] sm:$0xff]
    %v26 = vld [vmem:[%s1] sm:$0xff]
    %v27 = vld [vmem:[%s1 + $0x8] sm:$0xff]
    %v28 = vld [vmem:[%s1 + $0x10] sm:$0xff]
    %v29 = vld [vmem:[%s1 + $0x18] sm:$0xff]
    %v30 = vld [vmem:[%s1 + $0x20] sm:$0xff]
    %v31 = vld [vmem:[%s1 + $0x28] sm:$0xff]
    %v32 = vld [vmem:[%s1 + $0x30] sm:$0xff]
    %v33 = vld [vmem:[%s1 + $0x38] sm:$0xff]
    %v34 = vld [vmem:[%s1 + $0x40] sm:$0xff]
    %v35 = vld [vmem:[%s1 + $0x48] sm:$0xff]
    %37 = vset.pattern.permute.xlu0 0
    %38 = vperm.xlu0 %37, %v26
    %v39 = vpop.permute.xlu0 %38
    %42 = vset.pattern.permute.xlu0 0
    %43 = vperm.xlu0 %42, %v27
    %v44 = vpop.permute.xlu0 %43
    %47 = vset.pattern.permute.xlu0 0
    %48 = vperm.xlu0 %47, %v28
    %v49 = vpop.permute.xlu0 %48
    %52 = vset.pattern.permute.xlu0 0
    %53 = vperm.xlu0 %52, %v29
    %v54 = vpop.permute.xlu0 %53
    %57 = vset.pattern.permute.xlu0 0
    %58 = vperm.xlu0 %57, %v30
    %v59 = vpop.permute.xlu0 %58
    %62 = vset.pattern.permute.xlu0 0
    %63 = vperm.xlu0 %62, %v31
    %v64 = vpop.permute.xlu0 %63
    %67 = vset.pattern.permute.xlu0 0
    %68 = vperm.xlu0 %67, %v32
    %v69 = vpop.permute.xlu0 %68
    %72 = vset.pattern.permute.xlu0 0
    %73 = vperm.xlu0 %72, %v33
    %v74 = vpop.permute.xlu0 %73
    %77 = vset.pattern.permute.xlu0 0
    %78 = vperm.xlu0 %77, %v34
    %v79 = vpop.permute.xlu0 %78
    %82 = vset.pattern.permute.xlu0 0
    %83 = vperm.xlu0 %82, %v35
    %v84 = vpop.permute.xlu0 %83
    %v86 = vmul.f32 %v16, %v39
    %v87 = vmul.f32 %v17, %v44
    %v88 = vmul.f32 %v18, %v49
    %v89 = vmul.f32 %v19, %v54
    %v90 = vmul.f32 %v20, %v59
    %v91 = vmul.f32 %v21, %v64
    %v92 = vmul.f32 %v22, %v69
    %v93 = vmul.f32 %v23, %v74
    %v94 = vmul.f32 %v24, %v79
    %v95 = vmul.f32 %v25, %v84
    %vm96 = vcmask 15360
    %v97 = vsel %vm96, %v86, 0.0
    %v98 = vsel %vm96, %v87, 0.0
    %v99 = vadd.f32 %v97, %v98
    %v100 = vsel %vm96, %v88, 0.0
    %v101 = vadd.f32 %v99, %v100
    %v102 = vsel %vm96, %v89, 0.0
    %v103 = vadd.f32 %v101, %v102
    %v104 = vsel %vm96, %v90, 0.0
    %v105 = vadd.f32 %v103, %v104
    %v106 = vsel %vm96, %v91, 0.0
    %v107 = vadd.f32 %v105, %v106
    %v108 = vsel %vm96, %v92, 0.0
    %v109 = vadd.f32 %v107, %v108
    %v110 = vsel %vm96, %v93, 0.0
    %v111 = vadd.f32 %v109, %v110
    %v112 = vsel %vm96, %v94, 0.0
    %v113 = vadd.f32 %v111, %v112
    %v114 = vsel %vm96, %v95, 0.0
    %v115 = vadd.f32 %v113, %v114
    %v116 = vrot.slane %v115, 4
    %v117 = vadd.f32 %v115, %v116
    %v118 = vrot.slane %v117, 2
    %v119 = vadd.f32 %v117, %v118
    %v120 = vrot.slane %v119, 1
    %v121 = vadd.f32 %v119, %v120
    %s122 = sld [smem:[#allocation2]]
    %v123 = vstv %s122
    %v124 = vadd.f32 %v121, %v123
    %vm125 = vcmask 8192
    %126 = vst.msk [vmem:[#allocation3] sm:$0x1] %vm125, %v124
    // Predicated region
    $region14: #{multimodal_forward.1} parent=1 // pred_check
      _
    $region15: #{multimodal_forward.1} parent=1 // pred_check_branch
      %128 = sbr.rel (0) target = $region17
    $region16: #{multimodal_forward.1} parent=1 // pred_region
      %s130 = ssub.s32 16, 16
      %131 = vsyncadd [#allocation4], %s130
      %s133 = sshll.u32 [#allocation3], 4
      %s134 = int_to_ptr.vmem [resolvable:$true] %s133
      %136 = dma.vmem_to_hbm [thread:$0]  %s134, 16, %s3, [#allocation4]
    $region17: #{multimodal_forward.1} parent=1 // pred_fallthru
      _
    // Predicated region
    $region18: #{multimodal_forward.1} parent=1 // pred_check
      _
    $region19: #{multimodal_forward.1} parent=1 // pred_check_branch
      %138 = sbr.rel (0) target = $region21
    $region20: #{multimodal_forward.1} parent=1 // pred_region
      %139 = dma.done [#allocation4], 16
    $region21: #{multimodal_forward.1} parent=1 // pred_fallthru
      _
    %140 = vsyncpa [#allocation4], 1

</llo_original>
